<compile_context>
chip_gen: v7x
topology: tpu7x:2x2x1
jax: 0.10.0
libtpu: 0.0.40
codegen_flags: <defaults>
</compile_context>

<pallas_src>
import functools

import jax
import jax.numpy as jnp
from jax import lax
from jax.experimental import pallas as pl
from jax.experimental.pallas import tpu as pltpu


def _reorder_ifgo_to_ifog(w, H):
    """Reorder gate columns from PyTorch [i, f, g, o] to [i, f, o, g]."""
    return jnp.concatenate([w[:, :2 * H], w[:, 3 * H:4 * H], w[:, 2 * H:3 * H]],
                           axis=1)


def _make_lstm_fc_kernel(H, T, TT, needs_mask):
    """Kernel: runs TT timesteps of the LSTM recurrence per grid iteration.

    Inputs (refs):
      gx_ref  : (TT, B, 4H) precomputed x @ W_ih^T + bias for this time chunk,
                gate order [i, f, o, g]
      whh_ref : (H, 4H) recurrent weights, same gate order
      wfc_ref : (H, Cp) FC weights, class dim padded to a multiple of 128
      bfc_ref : (1, Cp)
    Outputs:
      fc_out_ref : (B, Cp)   (written on last grid step)
      h_out_ref  : (B, H)    (written on last grid step)
    Scratch:
      h_sc, c_sc : (B, H) recurrent state, persists across grid iterations.
    """

    def kernel(gx_ref, whh_ref, wfc_ref, bfc_ref, fc_out_ref, h_out_ref,
               h_sc, c_sc):
        chunk = pl.program_id(0)

        @pl.when(chunk == 0)
        def _():
            h_sc[...] = jnp.zeros_like(h_sc)
            c_sc[...] = jnp.zeros_like(c_sc)

        def step(j, carry):
            h, c = carry
            gates = gx_ref[j] + jnp.dot(h, whh_ref[...],
                                        preferred_element_type=jnp.float32)
            sig = jax.nn.sigmoid(gates[:, :3 * H])        # [i | f | o] contiguous
            i_g = sig[:, 0 * H:1 * H]
            f_g = sig[:, 1 * H:2 * H]
            o_g = sig[:, 2 * H:3 * H]
            g_g = jnp.tanh(gates[:, 3 * H:])              # [g]
            c_new = f_g * c + i_g * g_g
            h_new = o_g * jnp.tanh(c_new)
            if needs_mask:
                # Steps beyond the true sequence length (time padding) are no-ops.
                valid = (chunk * TT + j) < T
                c_new = jnp.where(valid, c_new, c)
                h_new = jnp.where(valid, h_new, h)
            return h_new, c_new

        h, c = lax.fori_loop(0, TT, step, (h_sc[...], c_sc[...]), unroll=True)
        h_sc[...] = h
        c_sc[...] = c

        @pl.when(chunk == pl.num_programs(0) - 1)
        def _():
            h_out_ref[...] = h
            fc_out_ref[...] = (jnp.dot(h, wfc_ref[...],
                                       preferred_element_type=jnp.float32)
                               + bfc_ref[...])

    return kernel


@functools.partial(jax.jit, static_argnames=("time_chunk",))
def diagnostic_rnn_forward(messages, params, *, time_chunk=16):
    """messages: (B, T) int32.  Returns (fc_out (B, C), h (B, H))."""
    emb_table = params["embedding"]            # (V, E)
    w_ih_t = params["w_ih_t"]                  # (E, 4H)  PyTorch gate order [i,f,g,o]
    w_hh_t = params["w_hh_t"]                  # (H, 4H)
    bias = params["bias"]                      # (1, 4H)  (b_ih + b_hh)
    w_fc_t = params["w_fc_t"]                  # (H, C)
    b_fc = params["b_fc"]                      # (1, C)

    B, T = messages.shape
    H = w_hh_t.shape[0]
    C = w_fc_t.shape[1]
    G = 4 * H

    # Gate-column reorder [i,f,g,o] -> [i,f,o,g] (sigmoid lanes contiguous).
    w_ih_p = _reorder_ifgo_to_ifog(w_ih_t, H)
    w_hh_p = _reorder_ifgo_to_ifog(w_hh_t, H)
    bias_p = _reorder_ifgo_to_ifog(bias, H)

    # Time-major embedding gather (no transpose round-trip), then the hoisted
    # input projection for ALL timesteps as one well-shaped matmul.
    emb_tbe = jnp.take(emb_table, messages.T, axis=0)              # (T, B, E)
    gx = jnp.einsum("tbe,eg->tbg", emb_tbe, w_ih_p,
                    preferred_element_type=jnp.float32) + bias_p   # (T, B, 4H)

    # Multiple timesteps per grid iteration; pad time so TT divides it.
    TT = min(T, time_chunk)
    n_chunks = -(-T // TT)
    Tp = n_chunks * TT
    if Tp != T:
        gx = jnp.pad(gx, ((0, Tp - T), (0, 0), (0, 0)))

    # Lane-dense FC output: pad class dim up to a multiple of 128.
    Cp = ((C + 127) // 128) * 128
    w_fc_pad = jnp.pad(w_fc_t, ((0, 0), (0, Cp - C)))
    b_fc_pad = jnp.pad(b_fc, ((0, 0), (0, Cp - C)))

    kernel = _make_lstm_fc_kernel(H=H, T=T, TT=TT, needs_mask=(Tp != T))

    const2d = lambda shape: pl.BlockSpec(shape, lambda i: (0, 0))

    fc_pad, h_out = pl.pallas_call(
        kernel,
        out_shape=(jax.ShapeDtypeStruct((B, Cp), jnp.float32),
                   jax.ShapeDtypeStruct((B, H), jnp.float32)),
        grid_spec=pltpu.PrefetchScalarGridSpec(
            num_scalar_prefetch=0,
            grid=(n_chunks,),
            in_specs=[
                pl.BlockSpec((TT, B, G), lambda i: (i, 0, 0)),   # gates_x chunk
                const2d((H, G)),                                 # W_hh^T
                const2d((H, Cp)),                                # W_fc^T (padded)
                const2d((1, Cp)),                                # b_fc   (padded)
            ],
            out_specs=[
                pl.BlockSpec((B, Cp), lambda i: (0, 0)),
                pl.BlockSpec((B, H), lambda i: (0, 0)),
            ],
            scratch_shapes=[
                pltpu.VMEM((B, H), jnp.float32),   # h state
                pltpu.VMEM((B, H), jnp.float32),   # c state
            ],
        ),
        compiler_params=pltpu.CompilerParams(
            dimension_semantics=("arbitrary",)),   # serial recurrence over time
    )(gx, w_hh_p, w_fc_pad, b_fc_pad)

    return fc_pad[:, :C], h_out


def init_params(key, vocab_size, embedding_size, num_hidden, num_classes):
    ks = jax.random.split(key, 7)
    scale = 0.1
    return {
        "embedding": scale * jax.random.normal(ks[0], (vocab_size, embedding_size), jnp.float32),
        "w_ih_t": scale * jax.random.normal(ks[1], (embedding_size, 4 * num_hidden), jnp.float32),
        "w_hh_t": scale * jax.random.normal(ks[2], (num_hidden, 4 * num_hidden), jnp.float32),
        "bias": scale * jax.random.normal(ks[3], (1, 4 * num_hidden), jnp.float32),
        "w_fc_t": scale * jax.random.normal(ks[4], (num_hidden, num_classes), jnp.float32),
        "b_fc": scale * jax.random.normal(ks[5], (1, num_classes), jnp.float32),
    }


def _reference_forward(messages, params):
    """Pure-JAX reference (matches PyTorch LSTM semantics, gate order i,f,g,o)."""
    emb = jnp.take(params["embedding"], messages, axis=0)  # (B, T, E)
    B, T, E = emb.shape
    H = params["w_hh_t"].shape[0]

    def step(carry, x_t):
        h, c = carry
        gates = x_t @ params["w_ih_t"] + h @ params["w_hh_t"] + params["bias"]
        i = jax.nn.sigmoid(gates[:, 0 * H:1 * H])
        f = jax.nn.sigmoid(gates[:, 1 * H:2 * H])
        g = jnp.tanh(gates[:, 2 * H:3 * H])
        o = jax.nn.sigmoid(gates[:, 3 * H:4 * H])
        c = f * c + i * g
        h = o * jnp.tanh(c)
        return (h, c), None

    h0 = jnp.zeros((B, H), jnp.float32)
    (h, _c), _ = jax.lax.scan(step, (h0, h0), jnp.transpose(emb, (1, 0, 2)))
    fc_out = h @ params["w_fc_t"] + params["b_fc"]
    return fc_out, h


if __name__ == "__main__":
    # Small shapes consistent with the module (embedding=64, hidden=64, classes=5).
    VOCAB, E, H, C = 25, 64, 64, 5

    key = jax.random.PRNGKey(0)
    pkey, mkey1, mkey2 = jax.random.split(key, 3)
    params = init_params(pkey, VOCAB, E, H, C)

    # Case 1: T fits in one chunk (grid=(1,)).  Case 2: T=20 exercises the
    # multi-chunk path with time padding/masking (grid=(2,), TT=16).
    for B, T, mkey in [(8, 8, mkey1), (8, 20, mkey2)]:
        messages = jax.random.randint(mkey, (B, T), 0, VOCAB, dtype=jnp.int32)
        fc_out, h = jax.block_until_ready(diagnostic_rnn_forward(messages, params))

        ref_fc, ref_h = _reference_forward(messages, params)
        assert fc_out.shape == (B, C) and h.shape == (B, H)
        assert jnp.allclose(fc_out, ref_fc, atol=2e-5), f"fc_out mismatch (B={B}, T={T})"
        assert jnp.allclose(h, ref_h, atol=2e-5), f"hidden state mismatch (B={B}, T={T})"

    print("KERNEL_OK")
</pallas_src>

<mosaic_0001>
module attributes {stable_mosaic.version = 11 : i64} {
  func.func @kernel(%arg0: i32, %arg1: memref<8x8x256xf32, #tpu.memory_space<vmem>>, %arg2: memref<64x256xf32, #tpu.memory_space<vmem>>, %arg3: memref<64x128xf32, #tpu.memory_space<vmem>>, %arg4: memref<1x128xf32, #tpu.memory_space<vmem>>, %arg5: memref<8x128xf32, #tpu.memory_space<vmem>>, %arg6: memref<8x64xf32, #tpu.memory_space<vmem>>, %arg7: memref<8x64xf32, #tpu.memory_space<vmem>>, %arg8: memref<8x64xf32, #tpu.memory_space<vmem>>) attributes {dimension_semantics = [#tpu.dimension_semantics<arbitrary>], iteration_bounds = array<i64: 1>, scalar_prefetch = 0 : i64, scratch_operands = 2 : i64, tpu.core_type = #tpu.core_type<tc>, window_params = [{transform_indices = @transform_0, window_bounds = array<i64: 8, 8, 256>}, {pipeline_mode = #tpu.pipeline_mode<synchronous>, transform_indices = @transform_1, window_bounds = array<i64: 64, 256>}, {pipeline_mode = #tpu.pipeline_mode<synchronous>, transform_indices = @transform_2, window_bounds = array<i64: 64, 128>}, {pipeline_mode = #tpu.pipeline_mode<synchronous>, transform_indices = @transform_3, window_bounds = array<i64: 1, 128>}, {pipeline_mode = #tpu.pipeline_mode<synchronous>, transform_indices = @transform_4, window_bounds = array<i64: 8, 128>}, {pipeline_mode = #tpu.pipeline_mode<synchronous>, transform_indices = @transform_5, window_bounds = array<i64: 8, 64>}]} {
    %c0_i32 = arith.constant 0 : i32
    %0 = arith.cmpi eq, %arg0, %c0_i32 : i32
    %1 = arith.extui %0 : i1 to i32
    %c0_i32_0 = arith.constant 0 : i32
    %2 = arith.cmpi ne, %1, %c0_i32_0 : i32
    scf.if %2 {
      %cst_58 = arith.constant 0.000000e+00 : f32
      %186 = vector.broadcast %cst_58 : f32 to vector<8x64xf32>
      %c0_59 = arith.constant 0 : index
      %c0_60 = arith.constant 0 : index
      %187 = vector.load %arg7[%c0_59, %c0_60] : memref<8x64xf32, #tpu.memory_space<vmem>>, vector<8x64xf32>
      tpu.vector_store %arg7[%c0_59, %c0_60], %186 {strides = array<i32>} : memref<8x64xf32, #tpu.memory_space<vmem>>, vector<8x64xf32>,
      %cst_61 = arith.constant 0.000000e+00 : f32
      %188 = vector.broadcast %cst_61 : f32 to vector<8x64xf32>
      %c0_62 = arith.constant 0 : index
      %c0_63 = arith.constant 0 : index
      %189 = vector.load %arg8[%c0_62, %c0_63] : memref<8x64xf32, #tpu.memory_space<vmem>>, vector<8x64xf32>
      tpu.vector_store %arg8[%c0_62, %c0_63], %188 {strides = array<i32>} : memref<8x64xf32, #tpu.memory_space<vmem>>, vector<8x64xf32>,
    } else {
    }
    %c0 = arith.constant 0 : index
    %c0_1 = arith.constant 0 : index
    %3 = vector.load %arg7[%c0, %c0_1] : memref<8x64xf32, #tpu.memory_space<vmem>>, vector<8x64xf32>
    %c0_2 = arith.constant 0 : index
    %c0_3 = arith.constant 0 : index
    %4 = vector.load %arg8[%c0_2, %c0_3] : memref<8x64xf32, #tpu.memory_space<vmem>>, vector<8x64xf32>
    %c0_i32_4 = arith.constant 0 : i32
    %5 = arith.index_cast %c0_i32_4 : i32 to index
    %c0_5 = arith.constant 0 : index
    %c0_6 = arith.constant 0 : index
    %6 = vector.load %arg1[%5, %c0_5, %c0_6] : memref<8x8x256xf32, #tpu.memory_space<vmem>>, vector<1x8x256xf32>
    %7 = vector.shape_cast %6 : vector<1x8x256xf32> to vector<8x256xf32>
    %c0_7 = arith.constant 0 : index
    %c0_8 = arith.constant 0 : index
    %8 = vector.load %arg2[%c0_7, %c0_8] : memref<64x256xf32, #tpu.memory_space<vmem>>, vector<64x256xf32>
    %cst = arith.constant dense<0.000000e+00> : vector<8x256xf32>
    %9 = tpu.matmul %3, %8, %cst {dimension_numbers = #tpu.dot_dimension_numbers<[1], [0], [0], [1], [0, 0, 1, 1], [], []>} : vector<8x64xf32>, vector<64x256xf32>, vector<8x256xf32> -> vector<8x256xf32>
    %10 = arith.addf %7, %9 : vector<8x256xf32>
    %11 = vector.extract_strided_slice %10 {offsets = [0, 0], sizes = [8, 192], strides = [1, 1]} : vector<8x256xf32> to vector<8x192xf32>
    %12 = arith.negf %11 : vector<8x192xf32>
    %13 = math.exp %12 : vector<8x192xf32>
    %cst_9 = arith.constant 1.000000e+00 : f32
    %14 = vector.broadcast %cst_9 : f32 to vector<8x192xf32>
    %15 = arith.addf %14, %13 : vector<8x192xf32>
    %16 = arith.divf %14, %15 : vector<8x192xf32>
    %17 = vector.extract_strided_slice %16 {offsets = [0, 0], sizes = [8, 64], strides = [1, 1]} : vector<8x192xf32> to vector<8x64xf32>
    %18 = vector.extract_strided_slice %16 {offsets = [0, 64], sizes = [8, 64], strides = [1, 1]} : vector<8x192xf32> to vector<8x64xf32>
    %19 = vector.extract_strided_slice %16 {offsets = [0, 128], sizes = [8, 64], strides = [1, 1]} : vector<8x192xf32> to vector<8x64xf32>
    %20 = vector.extract_strided_slice %10 {offsets = [0, 192], sizes = [8, 64], strides = [1, 1]} : vector<8x256xf32> to vector<8x64xf32>
    %21 = math.tanh %20 : vector<8x64xf32>
    %22 = arith.mulf %18, %4 : vector<8x64xf32>
    %23 = arith.mulf %17, %21 : vector<8x64xf32>
    %24 = arith.addf %22, %23 : vector<8x64xf32>
    %25 = math.tanh %24 : vector<8x64xf32>
    %26 = arith.mulf %19, %25 : vector<8x64xf32>
    %c1_i32 = arith.constant 1 : i32
    %27 = arith.index_cast %c1_i32 : i32 to index
    %c0_10 = arith.constant 0 : index
    %c0_11 = arith.constant 0 : index
    %28 = vector.load %arg1[%27, %c0_10, %c0_11] : memref<8x8x256xf32, #tpu.memory_space<vmem>>, vector<1x8x256xf32>
    %29 = vector.shape_cast %28 : vector<1x8x256xf32> to vector<8x256xf32>
    %c0_12 = arith.constant 0 : index
    %c0_13 = arith.constant 0 : index
    %30 = vector.load %arg2[%c0_12, %c0_13] : memref<64x256xf32, #tpu.memory_space<vmem>>, vector<64x256xf32>
    %cst_14 = arith.constant dense<0.000000e+00> : vector<8x256xf32>
    %31 = tpu.matmul %26, %30, %cst_14 {dimension_numbers = #tpu.dot_dimension_numbers<[1], [0], [0], [1], [0, 0, 1, 1], [], []>} : vector<8x64xf32>, vector<64x256xf32>, vector<8x256xf32> -> vector<8x256xf32>
    %32 = arith.addf %29, %31 : vector<8x256xf32>
    %33 = vector.extract_strided_slice %32 {offsets = [0, 0], sizes = [8, 192], strides = [1, 1]} : vector<8x256xf32> to vector<8x192xf32>
    %34 = arith.negf %33 : vector<8x192xf32>
    %35 = math.exp %34 : vector<8x192xf32>
    %cst_15 = arith.constant 1.000000e+00 : f32
    %36 = vector.broadcast %cst_15 : f32 to vector<8x192xf32>
    %37 = arith.addf %36, %35 : vector<8x192xf32>
    %38 = arith.divf %36, %37 : vector<8x192xf32>
    %39 = vector.extract_strided_slice %38 {offsets = [0, 0], sizes = [8, 64], strides = [1, 1]} : vector<8x192xf32> to vector<8x64xf32>
    %40 = vector.extract_strided_slice %38 {offsets = [0, 64], sizes = [8, 64], strides = [1, 1]} : vector<8x192xf32> to vector<8x64xf32>
    %41 = vector.extract_strided_slice %38 {offsets = [0, 128], sizes = [8, 64], strides = [1, 1]} : vector<8x192xf32> to vector<8x64xf32>
    %42 = vector.extract_strided_slice %32 {offsets = [0, 192], sizes = [8, 64], strides = [1, 1]} : vector<8x256xf32> to vector<8x64xf32>
    %43 = math.tanh %42 : vector<8x64xf32>
    %44 = arith.mulf %40, %24 : vector<8x64xf32>
    %45 = arith.mulf %39, %43 : vector<8x64xf32>
    %46 = arith.addf %44, %45 : vector<8x64xf32>
    %47 = math.tanh %46 : vector<8x64xf32>
    %48 = arith.mulf %41, %47 : vector<8x64xf32>
    %c2_i32 = arith.constant 2 : i32
    %49 = arith.index_cast %c2_i32 : i32 to index
    %c0_16 = arith.constant 0 : index
    %c0_17 = arith.constant 0 : index
    %50 = vector.load %arg1[%49, %c0_16, %c0_17] : memref<8x8x256xf32, #tpu.memory_space<vmem>>, vector<1x8x256xf32>
    %51 = vector.shape_cast %50 : vector<1x8x256xf32> to vector<8x256xf32>
    %c0_18 = arith.constant 0 : index
    %c0_19 = arith.constant 0 : index
    %52 = vector.load %arg2[%c0_18, %c0_19] : memref<64x256xf32, #tpu.memory_space<vmem>>, vector<64x256xf32>
    %cst_20 = arith.constant dense<0.000000e+00> : vector<8x256xf32>
    %53 = tpu.matmul %48, %52, %cst_20 {dimension_numbers = #tpu.dot_dimension_numbers<[1], [0], [0], [1], [0, 0, 1, 1], [], []>} : vector<8x64xf32>, vector<64x256xf32>, vector<8x256xf32> -> vector<8x256xf32>
    %54 = arith.addf %51, %53 : vector<8x256xf32>
    %55 = vector.extract_strided_slice %54 {offsets = [0, 0], sizes = [8, 192], strides = [1, 1]} : vector<8x256xf32> to vector<8x192xf32>
    %56 = arith.negf %55 : vector<8x192xf32>
    %57 = math.exp %56 : vector<8x192xf32>
    %cst_21 = arith.constant 1.000000e+00 : f32
    %58 = vector.broadcast %cst_21 : f32 to vector<8x192xf32>
    %59 = arith.addf %58, %57 : vector<8x192xf32>
    %60 = arith.divf %58, %59 : vector<8x192xf32>
    %61 = vector.extract_strided_slice %60 {offsets = [0, 0], sizes = [8, 64], strides = [1, 1]} : vector<8x192xf32> to vector<8x64xf32>
    %62 = vector.extract_strided_slice %60 {offsets = [0, 64], sizes = [8, 64], strides = [1, 1]} : vector<8x192xf32> to vector<8x64xf32>
    %63 = vector.extract_strided_slice %60 {offsets = [0, 128], sizes = [8, 64], strides = [1, 1]} : vector<8x192xf32> to vector<8x64xf32>
    %64 = vector.extract_strided_slice %54 {offsets = [0, 192], sizes = [8, 64], strides = [1, 1]} : vector<8x256xf32> to vector<8x64xf32>
    %65 = math.tanh %64 : vector<8x64xf32>
    %66 = arith.mulf %62, %46 : vector<8x64xf32>
    %67 = arith.mulf %61, %65 : vector<8x64xf32>
    %68 = arith.addf %66, %67 : vector<8x64xf32>
    %69 = math.tanh %68 : vector<8x64xf32>
    %70 = arith.mulf %63, %69 : vector<8x64xf32>
    %c3_i32 = arith.constant 3 : i32
    %71 = arith.index_cast %c3_i32 : i32 to index
    %c0_22 = arith.constant 0 : index
    %c0_23 = arith.constant 0 : index
    %72 = vector.load %arg1[%71, %c0_22, %c0_23] : memref<8x8x256xf32, #tpu.memory_space<vmem>>, vector<1x8x256xf32>
    %73 = vector.shape_cast %72 : vector<1x8x256xf32> to vector<8x256xf32>
    %c0_24 = arith.constant 0 : index
    %c0_25 = arith.constant 0 : index
    %74 = vector.load %arg2[%c0_24, %c0_25] : memref<64x256xf32, #tpu.memory_space<vmem>>, vector<64x256xf32>
    %cst_26 = arith.constant dense<0.000000e+00> : vector<8x256xf32>
    %75 = tpu.matmul %70, %74, %cst_26 {dimension_numbers = #tpu.dot_dimension_numbers<[1], [0], [0], [1], [0, 0, 1, 1], [], []>} : vector<8x64xf32>, vector<64x256xf32>, vector<8x256xf32> -> vector<8x256xf32>
    %76 = arith.addf %73, %75 : vector<8x256xf32>
    %77 = vector.extract_strided_slice %76 {offsets = [0, 0], sizes = [8, 192], strides = [1, 1]} : vector<8x256xf32> to vector<8x192xf32>
    %78 = arith.negf %77 : vector<8x192xf32>
    %79 = math.exp %78 : vector<8x192xf32>
    %cst_27 = arith.constant 1.000000e+00 : f32
    %80 = vector.broadcast %cst_27 : f32 to vector<8x192xf32>
    %81 = arith.addf %80, %79 : vector<8x192xf32>
    %82 = arith.divf %80, %81 : vector<8x192xf32>
    %83 = vector.extract_strided_slice %82 {offsets = [0, 0], sizes = [8, 64], strides = [1, 1]} : vector<8x192xf32> to vector<8x64xf32>
    %84 = vector.extract_strided_slice %82 {offsets = [0, 64], sizes = [8, 64], strides = [1, 1]} : vector<8x192xf32> to vector<8x64xf32>
    %85 = vector.extract_strided_slice %82 {offsets = [0, 128], sizes = [8, 64], strides = [1, 1]} : vector<8x192xf32> to vector<8x64xf32>
    %86 = vector.extract_strided_slice %76 {offsets = [0, 192], sizes = [8, 64], strides = [1, 1]} : vector<8x256xf32> to vector<8x64xf32>
    %87 = math.tanh %86 : vector<8x64xf32>
    %88 = arith.mulf %84, %68 : vector<8x64xf32>
    %89 = arith.mulf %83, %87 : vector<8x64xf32>
    %90 = arith.addf %88, %89 : vector<8x64xf32>
    %91 = math.tanh %90 : vector<8x64xf32>
    %92 = arith.mulf %85, %91 : vector<8x64xf32>
    %c4_i32 = arith.constant 4 : i32
    %93 = arith.index_cast %c4_i32 : i32 to index
    %c0_28 = arith.constant 0 : index
    %c0_29 = arith.constant 0 : index
    %94 = vector.load %arg1[%93, %c0_28, %c0_29] : memref<8x8x256xf32, #tpu.memory_space<vmem>>, vector<1x8x256xf32>
    %95 = vector.shape_cast %94 : vector<1x8x256xf32> to vector<8x256xf32>
    %c0_30 = arith.constant 0 : index
    %c0_31 = arith.constant 0 : index
    %96 = vector.load %arg2[%c0_30, %c0_31] : memref<64x256xf32, #tpu.memory_space<vmem>>, vector<64x256xf32>
    %cst_32 = arith.constant dense<0.000000e+00> : vector<8x256xf32>
    %97 = tpu.matmul %92, %96, %cst_32 {dimension_numbers = #tpu.dot_dimension_numbers<[1], [0], [0], [1], [0, 0, 1, 1], [], []>} : vector<8x64xf32>, vector<64x256xf32>, vector<8x256xf32> -> vector<8x256xf32>
    %98 = arith.addf %95, %97 : vector<8x256xf32>
    %99 = vector.extract_strided_slice %98 {offsets = [0, 0], sizes = [8, 192], strides = [1, 1]} : vector<8x256xf32> to vector<8x192xf32>
    %100 = arith.negf %99 : vector<8x192xf32>
    %101 = math.exp %100 : vector<8x192xf32>
    %cst_33 = arith.constant 1.000000e+00 : f32
    %102 = vector.broadcast %cst_33 : f32 to vector<8x192xf32>
    %103 = arith.addf %102, %101 : vector<8x192xf32>
    %104 = arith.divf %102, %103 : vector<8x192xf32>
    %105 = vector.extract_strided_slice %104 {offsets = [0, 0], sizes = [8, 64], strides = [1, 1]} : vector<8x192xf32> to vector<8x64xf32>
    %106 = vector.extract_strided_slice %104 {offsets = [0, 64], sizes = [8, 64], strides = [1, 1]} : vector<8x192xf32> to vector<8x64xf32>
    %107 = vector.extract_strided_slice %104 {offsets = [0, 128], sizes = [8, 64], strides = [1, 1]} : vector<8x192xf32> to vector<8x64xf32>
    %108 = vector.extract_strided_slice %98 {offsets = [0, 192], sizes = [8, 64], strides = [1, 1]} : vector<8x256xf32> to vector<8x64xf32>
    %109 = math.tanh %108 : vector<8x64xf32>
    %110 = arith.mulf %106, %90 : vector<8x64xf32>
    %111 = arith.mulf %105, %109 : vector<8x64xf32>
    %112 = arith.addf %110, %111 : vector<8x64xf32>
    %113 = math.tanh %112 : vector<8x64xf32>
    %114 = arith.mulf %107, %113 : vector<8x64xf32>
    %c5_i32 = arith.constant 5 : i32
    %115 = arith.index_cast %c5_i32 : i32 to index
    %c0_34 = arith.constant 0 : index
    %c0_35 = arith.constant 0 : index
    %116 = vector.load %arg1[%115, %c0_34, %c0_35] : memref<8x8x256xf32, #tpu.memory_space<vmem>>, vector<1x8x256xf32>
    %117 = vector.shape_cast %116 : vector<1x8x256xf32> to vector<8x256xf32>
    %c0_36 = arith.constant 0 : index
    %c0_37 = arith.constant 0 : index
    %118 = vector.load %arg2[%c0_36, %c0_37] : memref<64x256xf32, #tpu.memory_space<vmem>>, vector<64x256xf32>
    %cst_38 = arith.constant dense<0.000000e+00> : vector<8x256xf32>
    %119 = tpu.matmul %114, %118, %cst_38 {dimension_numbers = #tpu.dot_dimension_numbers<[1], [0], [0], [1], [0, 0, 1, 1], [], []>} : vector<8x64xf32>, vector<64x256xf32>, vector<8x256xf32> -> vector<8x256xf32>
    %120 = arith.addf %117, %119 : vector<8x256xf32>
    %121 = vector.extract_strided_slice %120 {offsets = [0, 0], sizes = [8, 192], strides = [1, 1]} : vector<8x256xf32> to vector<8x192xf32>
    %122 = arith.negf %121 : vector<8x192xf32>
    %123 = math.exp %122 : vector<8x192xf32>
    %cst_39 = arith.constant 1.000000e+00 : f32
    %124 = vector.broadcast %cst_39 : f32 to vector<8x192xf32>
    %125 = arith.addf %124, %123 : vector<8x192xf32>
    %126 = arith.divf %124, %125 : vector<8x192xf32>
    %127 = vector.extract_strided_slice %126 {offsets = [0, 0], sizes = [8, 64], strides = [1, 1]} : vector<8x192xf32> to vector<8x64xf32>
    %128 = vector.extract_strided_slice %126 {offsets = [0, 64], sizes = [8, 64], strides = [1, 1]} : vector<8x192xf32> to vector<8x64xf32>
    %129 = vector.extract_strided_slice %126 {offsets = [0, 128], sizes = [8, 64], strides = [1, 1]} : vector<8x192xf32> to vector<8x64xf32>
    %130 = vector.extract_strided_slice %120 {offsets = [0, 192], sizes = [8, 64], strides = [1, 1]} : vector<8x256xf32> to vector<8x64xf32>
    %131 = math.tanh %130 : vector<8x64xf32>
    %132 = arith.mulf %128, %112 : vector<8x64xf32>
    %133 = arith.mulf %127, %131 : vector<8x64xf32>
    %134 = arith.addf %132, %133 : vector<8x64xf32>
    %135 = math.tanh %134 : vector<8x64xf32>
    %136 = arith.mulf %129, %135 : vector<8x64xf32>
    %c6_i32 = arith.constant 6 : i32
    %137 = arith.index_cast %c6_i32 : i32 to index
    %c0_40 = arith.constant 0 : index
    %c0_41 = arith.constant 0 : index
    %138 = vector.load %arg1[%137, %c0_40, %c0_41] : memref<8x8x256xf32, #tpu.memory_space<vmem>>, vector<1x8x256xf32>
    %139 = vector.shape_cast %138 : vector<1x8x256xf32> to vector<8x256xf32>
    %c0_42 = arith.constant 0 : index
    %c0_43 = arith.constant 0 : index
    %140 = vector.load %arg2[%c0_42, %c0_43] : memref<64x256xf32, #tpu.memory_space<vmem>>, vector<64x256xf32>
    %cst_44 = arith.constant dense<0.000000e+00> : vector<8x256xf32>
    %141 = tpu.matmul %136, %140, %cst_44 {dimension_numbers = #tpu.dot_dimension_numbers<[1], [0], [0], [1], [0, 0, 1, 1], [], []>} : vector<8x64xf32>, vector<64x256xf32>, vector<8x256xf32> -> vector<8x256xf32>
    %142 = arith.addf %139, %141 : vector<8x256xf32>
    %143 = vector.extract_strided_slice %142 {offsets = [0, 0], sizes = [8, 192], strides = [1, 1]} : vector<8x256xf32> to vector<8x192xf32>
    %144 = arith.negf %143 : vector<8x192xf32>
    %145 = math.exp %144 : vector<8x192xf32>
    %cst_45 = arith.constant 1.000000e+00 : f32
    %146 = vector.broadcast %cst_45 : f32 to vector<8x192xf32>
    %147 = arith.addf %146, %145 : vector<8x192xf32>
    %148 = arith.divf %146, %147 : vector<8x192xf32>
    %149 = vector.extract_strided_slice %148 {offsets = [0, 0], sizes = [8, 64], strides = [1, 1]} : vector<8x192xf32> to vector<8x64xf32>
    %150 = vector.extract_strided_slice %148 {offsets = [0, 64], sizes = [8, 64], strides = [1, 1]} : vector<8x192xf32> to vector<8x64xf32>
    %151 = vector.extract_strided_slice %148 {offsets = [0, 128], sizes = [8, 64], strides = [1, 1]} : vector<8x192xf32> to vector<8x64xf32>
    %152 = vector.extract_strided_slice %142 {offsets = [0, 192], sizes = [8, 64], strides = [1, 1]} : vector<8x256xf32> to vector<8x64xf32>
    %153 = math.tanh %152 : vector<8x64xf32>
    %154 = arith.mulf %150, %134 : vector<8x64xf32>
    %155 = arith.mulf %149, %153 : vector<8x64xf32>
    %156 = arith.addf %154, %155 : vector<8x64xf32>
    %157 = math.tanh %156 : vector<8x64xf32>
    %158 = arith.mulf %151, %157 : vector<8x64xf32>
    %c7_i32 = arith.constant 7 : i32
    %159 = arith.index_cast %c7_i32 : i32 to index
    %c0_46 = arith.constant 0 : index
    %c0_47 = arith.constant 0 : index
    %160 = vector.load %arg1[%159, %c0_46, %c0_47] : memref<8x8x256xf32, #tpu.memory_space<vmem>>, vector<1x8x256xf32>
    %161 = vector.shape_cast %160 : vector<1x8x256xf32> to vector<8x256xf32>
    %c0_48 = arith.constant 0 : index
    %c0_49 = arith.constant 0 : index
    %162 = vector.load %arg2[%c0_48, %c0_49] : memref<64x256xf32, #tpu.memory_space<vmem>>, vector<64x256xf32>
    %cst_50 = arith.constant dense<0.000000e+00> : vector<8x256xf32>
    %163 = tpu.matmul %158, %162, %cst_50 {dimension_numbers = #tpu.dot_dimension_numbers<[1], [0], [0], [1], [0, 0, 1, 1], [], []>} : vector<8x64xf32>, vector<64x256xf32>, vector<8x256xf32> -> vector<8x256xf32>
    %164 = arith.addf %161, %163 : vector<8x256xf32>
    %165 = vector.extract_strided_slice %164 {offsets = [0, 0], sizes = [8, 192], strides = [1, 1]} : vector<8x256xf32> to vector<8x192xf32>
    %166 = arith.negf %165 : vector<8x192xf32>
    %167 = math.exp %166 : vector<8x192xf32>
    %cst_51 = arith.constant 1.000000e+00 : f32
    %168 = vector.broadcast %cst_51 : f32 to vector<8x192xf32>
    %169 = arith.addf %168, %167 : vector<8x192xf32>
    %170 = arith.divf %168, %169 : vector<8x192xf32>
    %171 = vector.extract_strided_slice %170 {offsets = [0, 0], sizes = [8, 64], strides = [1, 1]} : vector<8x192xf32> to vector<8x64xf32>
    %172 = vector.extract_strided_slice %170 {offsets = [0, 64], sizes = [8, 64], strides = [1, 1]} : vector<8x192xf32> to vector<8x64xf32>
    %173 = vector.extract_strided_slice %170 {offsets = [0, 128], sizes = [8, 64], strides = [1, 1]} : vector<8x192xf32> to vector<8x64xf32>
    %174 = vector.extract_strided_slice %164 {offsets = [0, 192], sizes = [8, 64], strides = [1, 1]} : vector<8x256xf32> to vector<8x64xf32>
    %175 = math.tanh %174 : vector<8x64xf32>
    %176 = arith.mulf %172, %156 : vector<8x64xf32>
    %177 = arith.mulf %171, %175 : vector<8x64xf32>
    %178 = arith.addf %176, %177 : vector<8x64xf32>
    %179 = math.tanh %178 : vector<8x64xf32>
    %180 = arith.mulf %173, %179 : vector<8x64xf32>
    %c8_i32 = arith.constant 8 : i32
    %c0_52 = arith.constant 0 : index
    %c0_53 = arith.constant 0 : index
    %181 = vector.load %arg7[%c0_52, %c0_53] : memref<8x64xf32, #tpu.memory_space<vmem>>, vector<8x64xf32>
    tpu.vector_store %arg7[%c0_52, %c0_53], %180 {strides = array<i32>} : memref<8x64xf32, #tpu.memory_space<vmem>>, vector<8x64xf32>,
    %c0_54 = arith.constant 0 : index
    %c0_55 = arith.constant 0 : index
    %182 = vector.load %arg8[%c0_54, %c0_55] : memref<8x64xf32, #tpu.memory_space<vmem>>, vector<8x64xf32>
    tpu.vector_store %arg8[%c0_54, %c0_55], %178 {strides = array<i32>} : memref<8x64xf32, #tpu.memory_space<vmem>>, vector<8x64xf32>,
    %c0_i32_56 = arith.constant 0 : i32
    %183 = arith.cmpi eq, %arg0, %c0_i32_56 : i32
    %184 = arith.extui %183 : i1 to i32
    %c0_i32_57 = arith.constant 0 : i32
    %185 = arith.cmpi ne, %184, %c0_i32_57 : i32
    scf.if %185 {
      %c0_58 = arith.constant 0 : index
      %c0_59 = arith.constant 0 : index
      %186 = vector.load %arg6[%c0_58, %c0_59] : memref<8x64xf32, #tpu.memory_space<vmem>>, vector<8x64xf32>
      tpu.vector_store %arg6[%c0_58, %c0_59], %180 {strides = array<i32>} : memref<8x64xf32, #tpu.memory_space<vmem>>, vector<8x64xf32>,
      %c0_60 = arith.constant 0 : index
      %c0_61 = arith.constant 0 : index
      %187 = vector.load %arg3[%c0_60, %c0_61] : memref<64x128xf32, #tpu.memory_space<vmem>>, vector<64x128xf32>
      %cst_62 = arith.constant dense<0.000000e+00> : vector<8x128xf32>
      %188 = tpu.matmul %180, %187, %cst_62 {dimension_numbers = #tpu.dot_dimension_numbers<[1], [0], [0], [1], [0, 0, 1, 1], [], []>} : vector<8x64xf32>, vector<64x128xf32>, vector<8x128xf32> -> vector<8x128xf32>
      %c0_63 = arith.constant 0 : index
      %c0_64 = arith.constant 0 : index
      %189 = vector.load %arg4[%c0_63, %c0_64] : memref<1x128xf32, #tpu.memory_space<vmem>>, vector<1x128xf32>
      %190 = vector.broadcast %189 : vector<1x128xf32> to vector<8x128xf32>
      %191 = arith.addf %188, %190 : vector<8x128xf32>
      %c0_65 = arith.constant 0 : index
      %c0_66 = arith.constant 0 : index
      %192 = vector.load %arg5[%c0_65, %c0_66] : memref<8x128xf32, #tpu.memory_space<vmem>>, vector<8x128xf32>
      tpu.vector_store %arg5[%c0_65, %c0_66], %191 {strides = array<i32>} : memref<8x128xf32, #tpu.memory_space<vmem>>, vector<8x128xf32>,
    } else {
    }
    return
  }
  func.func @transform_0(%arg0: i32) -> (i32, i32, i32) {
    %c0_i32 = arith.constant 0 : i32
    %c0_i32_0 = arith.constant 0 : i32
    %c0_i32_1 = arith.constant 0 : i32
    return %arg0, %c0_i32, %c0_i32_0 : i32, i32, i32
  }
  func.func @transform_1(%arg0: i32) -> (i32, i32) {
    %c0_i32 = arith.constant 0 : i32
    %c0_i32_0 = arith.constant 0 : i32
    %c0_i32_1 = arith.constant 0 : i32
    return %c0_i32, %c0_i32_0 : i32, i32
  }
  func.func @transform_2(%arg0: i32) -> (i32, i32) {
    %c0_i32 = arith.constant 0 : i32
    %c0_i32_0 = arith.constant 0 : i32
    %c0_i32_1 = arith.constant 0 : i32
    return %c0_i32, %c0_i32_0 : i32, i32
  }
  func.func @transform_3(%arg0: i32) -> (i32, i32) {
    %c0_i32 = arith.constant 0 : i32
    %c0_i32_0 = arith.constant 0 : i32
    %c0_i32_1 = arith.constant 0 : i32
    return %c0_i32, %c0_i32_0 : i32, i32
  }
  func.func @transform_4(%arg0: i32) -> (i32, i32) {
    %c0_i32 = arith.constant 0 : i32
    %c0_i32_0 = arith.constant 0 : i32
    %c0_i32_1 = arith.constant 0 : i32
    return %c0_i32, %c0_i32_0 : i32, i32
  }
  func.func @transform_5(%arg0: i32) -> (i32, i32) {
    %c0_i32 = arith.constant 0 : i32
    %c0_i32_0 = arith.constant 0 : i32
    %c0_i32_1 = arith.constant 0 : i32
    return %c0_i32, %c0_i32_0 : i32, i32
  }
}

</mosaic_0001>

<llo_original>
// kernel: diagnostic_rnn_forward.1
$region0: #{diagnostic_rnn_forward.1}
  #allocation0 [shape = 'u32[]', space=smem, size = 0x4, offset = 0x4, fixed_abs, tag = 'smem constant byte address 0x4 - core index']
  #allocation1 [shape = 'u32[144,128]{1,0:T(1,128)}', space=vmem, size = 0x12000, scoped, tag = 'internal scratch']
  #allocation2 [shape = 'f32[8,64]{1,0:T(8,128)}', space=vmem, size = 0x1000, scoped, tag = 'scratch operand']
  #allocation3 [shape = 'f32[8,64]{1,0:T(8,128)}', space=vmem, size = 0x1000, scoped, tag = 'scratch operand']
  %s0 = inlined_call_operand.vmem [shape: f32[8,8,256], index: 0, kind: input, shape index: {}]
  %s1 = inlined_call_operand.vmem [shape: f32[64,256], index: 1, kind: input, shape index: {}]
  %s2 = inlined_call_operand.vmem [shape: f32[64,128], index: 2, kind: input, shape index: {}]
  %s3 = inlined_call_operand.vmem [shape: f32[1,128], index: 3, kind: input, shape index: {}]
  %s4 = inlined_call_operand.hbm [shape: f32[8,128], index: 4, kind: output, shape index: {0}]
  %s5 = inlined_call_operand.hbm [shape: f32[8,64], index: 5, kind: output, shape index: {1}]
  %6 = xla_tuple %s4, %s5
  %s7 = sld [smem:[#allocation0]]
  $region42: #{diagnostic_rnn_forward.1} parent=0
    _
  %s9 = ssub.s32 1, %s7
  %s10 = scalar_select 0, %s9, %s7
  $region1: #{diagnostic_rnn_forward.1} parent=0
    #allocation4 [shape = 'u8[4096]{0}', space=vmem, size = 0x1000, scoped, tag = 'output window, operand 0, single buffered']
    #allocation5 [shape = 's32[1]{0}', space=sflag, size = 0x4, scoped, tag = 'scoped memory for diagnostic_rnn_forward.1']
    #allocation6 [shape = 'u8[4096]{0}', space=vmem, size = 0x1000, scoped, tag = 'output window, operand 1, single buffered']
    #allocation7 [shape = 's32[1]{0}', space=sflag, size = 0x4, scoped, tag = 'scoped memory for diagnostic_rnn_forward.1']
    %11 = vsyncpa [#allocation5], 0
    %12 = vsyncpa [#allocation7], 0
    // Predicated region
    $region2: #{diagnostic_rnn_forward.1} parent=1 // pred_check
      _
    $region3: #{diagnostic_rnn_forward.1} parent=1 // pred_check_branch
      %14 = sbr.rel (0) target = $region5
    $region4: #{diagnostic_rnn_forward.1} parent=1 // pred_region
      _
    $region5: #{diagnostic_rnn_forward.1} parent=1 // pred_fallthru
      _
    // Predicated region
    $region6: #{diagnostic_rnn_forward.1} parent=1 // pred_check
      _
    $region7: #{diagnostic_rnn_forward.1} parent=1 // pred_check_branch
      %16 = sbr.rel (0) target = $region9
    $region8: #{diagnostic_rnn_forward.1} parent=1 // pred_region
      _
    $region9: #{diagnostic_rnn_forward.1} parent=1 // pred_fallthru
      _
    // Predicated region
    $region10: #{diagnostic_rnn_forward.1} parent=1 // pred_check
      _
    $region11: #{diagnostic_rnn_forward.1} parent=1 // pred_check_branch
      %18 = sbr.rel (0) target = $region13
    $region12: #{diagnostic_rnn_forward.1} parent=1 // pred_region
      _
    $region13: #{diagnostic_rnn_forward.1} parent=1 // pred_fallthru
      _
    // Predicated region
    $region14: #{diagnostic_rnn_forward.1} parent=1 // pred_check
      _
    $region15: #{diagnostic_rnn_forward.1} parent=1 // pred_check_branch
      %20 = sbr.rel (0) target = $region17
    $region16: #{diagnostic_rnn_forward.1} parent=1 // pred_region
      _
    $region17: #{diagnostic_rnn_forward.1} parent=1 // pred_fallthru
      _
    %p21 = scmp.eq.s32.totalorder 0, 0
    // Predicated region
    $region18: #{diagnostic_rnn_forward.1} parent=1 // pred_check
      %p22 = pneg %p21
    $region19: #{diagnostic_rnn_forward.1} parent=1 // pred_check_branch
      %24 = sbr.rel (%p22) target = $region21
    $region20: #{diagnostic_rnn_forward.1} parent=1 // pred_region
      %vm25 = vcmask 523264
      %26 = vst.msk [vmem:[#allocation2] sm:$0xff] %vm25, 0.0
      %27 = vst.msk [vmem:[#allocation3] sm:$0xff] %vm25, 0.0
    $region21: #{diagnostic_rnn_forward.1} parent=1 // pred_fallthru
      _
    %v28 = vld [vmem:[#allocation2] sm:$0xff]
    %v29 = vld [vmem:[#allocation3] sm:$0xff]
    %v30 = vld [vmem:[%s0] sm:$0xff]
    %v31 = vld [vmem:[%s0 + $0x8] sm:$0xff]
    %v32 = vld [vmem:[%s1] sm:$0xff]
    %v33 = vld [vmem:[%s1 + $0x8] sm:$0xff]
    %v34 = vld [vmem:[%s1 + $0x10] sm:$0xff]
    %v35 = vld [vmem:[%s1 + $0x18] sm:$0xff]
    %v36 = vld [vmem:[%s1 + $0x20] sm:$0xff]
    %v37 = vld [vmem:[%s1 + $0x28] sm:$0xff]
    %v38 = vld [vmem:[%s1 + $0x30] sm:$0xff]
    %v39 = vld [vmem:[%s1 + $0x38] sm:$0xff]
    %v40 = vld [vmem:[%s1 + $0x40] sm:$0xff]
    %v41 = vld [vmem:[%s1 + $0x48] sm:$0xff]
    %v42 = vld [vmem:[%s1 + $0x50] sm:$0xff]
    %v43 = vld [vmem:[%s1 + $0x58] sm:$0xff]
    %v44 = vld [vmem:[%s1 + $0x60] sm:$0xff]
    %v45 = vld [vmem:[%s1 + $0x68] sm:$0xff]
    %v46 = vld [vmem:[%s1 + $0x70] sm:$0xff]
    %v47 = vld [vmem:[%s1 + $0x78] sm:$0xff]
    %vm48 = vcmask 523264
    %v50 = vsel %vm48, %v28, 0
    %52 = vmatprep.subr.mxu0 %v33
    %53 = vmatpush1.msra.mxu0 %v32
    %54 = vmatprep.subr.mxu0 %v35
    %55 = vmatpush1.msra.mxu0 %v34
    %56 = vmatprep.subr.mxu0 %v37
    %57 = vmatpush1.msra.mxu0 %v36
    %58 = vmatprep.subr.mxu0 %v39
    %59 = vmatpush1.msra.mxu0 %v38
    %60 = vmatprep.subr.mxu0 %v41
    %61 = vmatpush1.msra.mxu0 %v40
    %62 = vmatprep.subr.mxu0 %v43
    %63 = vmatpush1.msra.mxu0 %v42
    %64 = vmatprep.subr.mxu0 %v45
    %65 = vmatpush1.msra.mxu0 %v44
    %66 = vmatprep.subr.mxu0 %v47
    %67 = vmatpush1.msra.mxu0 %v46
    %68 = vmatprep.subr.mxu0 0.0
    %69 = vmatpush1.msra.mxu0 0.0
    %70 = vmatprep.subr.mxu0 0.0
    %71 = vmatpush1.msra.mxu0 0.0
    %72 = vmatprep.subr.mxu0 0.0
    %73 = vmatpush1.msra.mxu0 0.0
    %74 = vmatprep.subr.mxu0 0.0
    %75 = vmatpush1.msra.mxu0 0.0
    %76 = vmatprep.subr.mxu0 0.0
    %77 = vmatpush1.msra.mxu0 0.0
    %78 = vmatprep.subr.mxu0 0.0
    %79 = vmatpush1.msra.mxu0 0.0
    %80 = vmatprep.subr.mxu0 0.0
    %81 = vmatpush1.msra.mxu0 0.0
    %82 = vmatprep.subr.mxu0 0.0
    %83 = vmatpush1.msra.mxu0 0.0
    %84 = vmatprep.subr.mxu0 0.0
    %85 = vmatpush1.msra.mxu0 0.0
    %86 = vmatprep.subr.mxu0 0.0
    %87 = vmatpush1.msra.mxu0 0.0
    %88 = vmatprep.subr.mxu0 0.0
    %89 = vmatpush1.msra.mxu0 0.0
    %90 = vmatprep.subr.mxu0 0.0
    %91 = vmatpush1.msra.mxu0 0.0
    %92 = vmatprep.subr.mxu0 0.0
    %93 = vmatpush1.msra.mxu0 0.0
    %94 = vmatprep.subr.mxu0 0.0
    %95 = vmatpush1.msra.mxu0 0.0
    %96 = vmatprep.subr.mxu0 0.0
    %97 = vmatpush1.msra.mxu0 0.0
    %98 = vmatprep.subr.mxu0 0.0
    %99 = vmatpush1.msra.mxu0 0.0
    %100 = vmatprep.subr.mxu0 0.0
    %101 = vmatpush1.msra.mxu0 0.0
    %102 = vmatprep.subr.mxu0 0.0
    %103 = vmatpush1.msra.mxu0 0.0
    %104 = vmatprep.subr.mxu0 0.0
    %105 = vmatpush1.msra.mxu0 0.0
    %106 = vmatprep.subr.mxu0 0.0
    %107 = vmatpush1.msra.mxu0 0.0
    %108 = vmatprep.subr.mxu0 0.0
    %109 = vmatpush1.msra.mxu0 0.0
    %110 = vmatprep.subr.mxu0 0.0
    %111 = vmatpush1.msra.mxu0 0.0
    %112 = vmatprep.subr.mxu0 0.0
    %113 = vmatpush1.msra.mxu0 0.0
    %114 = vmatprep.subr.mxu0 0.0
    %115 = vmatpush1.msra.mxu0 0.0
    %116 = vmatprep.mubr.f32.mxu0 0.0
    %117 = vmatmul.mubr.f32.gmra.mrb[0].mxu0 %v50
    %v118 = vpop.f32.mrb[0].mxu0
    %v119 = vadd.f32 0.0, %v118
    %v120 = vpop.f32.mrb[0].mxu0
    %v121 = vadd.f32 0.0, %v120
    %122 = vdwg.mxu0
    %v123 = vadd.f32 %v30, %v119
    %v124 = vadd.f32 %v31, %v121
    %v125 = vxor.u32 %v123, 2147483648
    %v126 = vxor.u32 %v124, 2147483648
    %v127 = vmul.f32 %v125, 1.442695
    %v128 = vpow.pop %v127
    %v129 = vmul.f32 %v126, 1.442695
    %v130 = vpow.pop %v129
    %v131 = vadd.f32 %v128, 1.0
    %v132 = vadd.f32 %v130, 1.0
    %v133 = vrcp.pop %v131
    %v134 = vmul.f32 1.0, %v133
    %v135 = vrcp.pop %v132
    %v136 = vmul.f32 1.0, %v135
    %v137 = vtanh.pop %v124
    %139 = vrot.lane.b32.xlu0 %v29, 64
    %v140 = vpop.permute.xlu0 %139
    %v142 = vmul.f32 %v134, %v140
    %144 = vrot.lane.b32.xlu0 %v137, 64
    %v145 = vpop.permute.xlu0 %144
    %v147 = vmul.f32 %v134, %v145
    %149 = vrot.lane.b32.xlu0 %v147, 64
    %v150 = vpop.permute.xlu0 %149
    %v152 = vadd.f32 %v142, %v150
    %v153 = vtanh.pop %v152
    %155 = vrot.lane.b32.xlu0 %v153, 64
    %v156 = vpop.permute.xlu0 %155
    %v158 = vmul.f32 %v136, %v156
    %s159 = scalar_lea.vmem %s0, 16
    %v160 = vld [vmem:[%s159] sm:$0xff]
    %v161 = vld [vmem:[%s159 + $0x8] sm:$0xff]
    %v163 = vsel %vm48, %v158, 0
    %165 = vmatprep.subr.mxu0 %v33
    %166 = vmatpush1.msra.mxu0 %v32
    %167 = vmatprep.subr.mxu0 %v35
    %168 = vmatpush1.msra.mxu0 %v34
    %169 = vmatprep.subr.mxu0 %v37
    %170 = vmatpush1.msra.mxu0 %v36
    %171 = vmatprep.subr.mxu0 %v39
    %172 = vmatpush1.msra.mxu0 %v38
    %173 = vmatprep.subr.mxu0 %v41
    %174 = vmatpush1.msra.mxu0 %v40
    %175 = vmatprep.subr.mxu0 %v43
    %176 = vmatpush1.msra.mxu0 %v42
    %177 = vmatprep.subr.mxu0 %v45
    %178 = vmatpush1.msra.mxu0 %v44
    %179 = vmatprep.subr.mxu0 %v47
    %180 = vmatpush1.msra.mxu0 %v46
    %181 = vmatprep.subr.mxu0 0.0
    %182 = vmatpush1.msra.mxu0 0.0
    %183 = vmatprep.subr.mxu0 0.0
    %184 = vmatpush1.msra.mxu0 0.0
    %185 = vmatprep.subr.mxu0 0.0
    %186 = vmatpush1.msra.mxu0 0.0
    %187 = vmatprep.subr.mxu0 0.0
    %188 = vmatpush1.msra.mxu0 0.0
    %189 = vmatprep.subr.mxu0 0.0
    %190 = vmatpush1.msra.mxu0 0.0
    %191 = vmatprep.subr.mxu0 0.0
    %192 = vmatpush1.msra.mxu0 0.0
    %193 = vmatprep.subr.mxu0 0.0
    %194 = vmatpush1.msra.mxu0 0.0
    %195 = vmatprep.subr.mxu0 0.0
    %196 = vmatpush1.msra.mxu0 0.0
    %197 = vmatprep.subr.mxu0 0.0
    %198 = vmatpush1.msra.mxu0 0.0
    %199 = vmatprep.subr.mxu0 0.0
    %200 = vmatpush1.msra.mxu0 0.0
    %201 = vmatprep.subr.mxu0 0.0
    %202 = vmatpush1.msra.mxu0 0.0
    %203 = vmatprep.subr.mxu0 0.0
    %204 = vmatpush1.msra.mxu0 0.0
    %205 = vmatprep.subr.mxu0 0.0
    %206 = vmatpush1.msra.mxu0 0.0
    %207 = vmatprep.subr.mxu0 0.0
    %208 = vmatpush1.msra.mxu0 0.0
    %209 = vmatprep.subr.mxu0 0.0
    %210 = vmatpush1.msra.mxu0 0.0
    %211 = vmatprep.subr.mxu0 0.0
    %212 = vmatpush1.msra.mxu0 0.0
    %213 = vmatprep.subr.mxu0 0.0
    %214 = vmatpush1.msra.mxu0 0.0
    %215 = vmatprep.subr.mxu0 0.0
    %216 = vmatpush1.msra.mxu0 0.0
    %217 = vmatprep.subr.mxu0 0.0
    %218 = vmatpush1.msra.mxu0 0.0
    %219 = vmatprep.subr.mxu0 0.0
    %220 = vmatpush1.msra.mxu0 0.0
    %221 = vmatprep.subr.mxu0 0.0
    %222 = vmatpush1.msra.mxu0 0.0
    %223 = vmatprep.subr.mxu0 0.0
    %224 = vmatpush1.msra.mxu0 0.0
    %225 = vmatprep.subr.mxu0 0.0
    %226 = vmatpush1.msra.mxu0 0.0
    %227 = vmatprep.subr.mxu0 0.0
    %228 = vmatpush1.msra.mxu0 0.0
    %229 = vmatprep.mubr.f32.mxu0 0.0
    %230 = vmatmul.mubr.f32.gmra.mrb[0].mxu0 %v163
    %v231 = vpop.f32.mrb[0].mxu0
    %v232 = vadd.f32 0.0, %v231
    %v233 = vpop.f32.mrb[0].mxu0
    %v234 = vadd.f32 0.0, %v233
    %235 = vdwg.mxu0
    %v236 = vadd.f32 %v160, %v232
    %v237 = vadd.f32 %v161, %v234
    %v238 = vxor.u32 %v236, 2147483648
    %v239 = vxor.u32 %v237, 2147483648
    %v240 = vmul.f32 %v238, 1.442695
    %v241 = vpow.pop %v240
    %v242 = vmul.f32 %v239, 1.442695
    %v243 = vpow.pop %v242
    %v244 = vadd.f32 %v241, 1.0
    %v245 = vadd.f32 %v243, 1.0
    %v246 = vrcp.pop %v244
    %v247 = vmul.f32 1.0, %v246
    %v248 = vrcp.pop %v245
    %v249 = vmul.f32 1.0, %v248
    %v250 = vtanh.pop %v237
    %v251 = vmul.f32 %v247, %v152
    %253 = vrot.lane.b32.xlu0 %v250, 64
    %v254 = vpop.permute.xlu0 %253
    %v256 = vmul.f32 %v247, %v254
    %258 = vrot.lane.b32.xlu0 %v256, 64
    %v259 = vpop.permute.xlu0 %258
    %v261 = vadd.f32 %v251, %v259
    %v262 = vtanh.pop %v261
    %264 = vrot.lane.b32.xlu0 %v262, 64
    %v265 = vpop.permute.xlu0 %264
    %v267 = vmul.f32 %v249, %v265
    %s268 = scalar_lea.vmem %s0, 32
    %v269 = vld [vmem:[%s268] sm:$0xff]
    %v270 = vld [vmem:[%s268 + $0x8] sm:$0xff]
    %v272 = vsel %vm48, %v267, 0
    %274 = vmatprep.subr.mxu0 %v33
    %275 = vmatpush1.msra.mxu0 %v32
    %276 = vmatprep.subr.mxu0 %v35
    %277 = vmatpush1.msra.mxu0 %v34
    %278 = vmatprep.subr.mxu0 %v37
    %279 = vmatpush1.msra.mxu0 %v36
    %280 = vmatprep.subr.mxu0 %v39
    %281 = vmatpush1.msra.mxu0 %v38
    %282 = vmatprep.subr.mxu0 %v41
    %283 = vmatpush1.msra.mxu0 %v40
    %284 = vmatprep.subr.mxu0 %v43
    %285 = vmatpush1.msra.mxu0 %v42
    %286 = vmatprep.subr.mxu0 %v45
    %287 = vmatpush1.msra.mxu0 %v44
    %288 = vmatprep.subr.mxu0 %v47
    %289 = vmatpush1.msra.mxu0 %v46
    %290 = vmatprep.subr.mxu0 0.0
    %291 = vmatpush1.msra.mxu0 0.0
    %292 = vmatprep.subr.mxu0 0.0
    %293 = vmatpush1.msra.mxu0 0.0
    %294 = vmatprep.subr.mxu0 0.0
    %295 = vmatpush1.msra.mxu0 0.0
    %296 = vmatprep.subr.mxu0 0.0
    %297 = vmatpush1.msra.mxu0 0.0
    %298 = vmatprep.subr.mxu0 0.0
    %299 = vmatpush1.msra.mxu0 0.0
    %300 = vmatprep.subr.mxu0 0.0
    %301 = vmatpush1.msra.mxu0 0.0
    %302 = vmatprep.subr.mxu0 0.0
    %303 = vmatpush1.msra.mxu0 0.0
    %304 = vmatprep.subr.mxu0 0.0
    %305 = vmatpush1.msra.mxu0 0.0
    %306 = vmatprep.subr.mxu0 0.0
    %307 = vmatpush1.msra.mxu0 0.0
    %308 = vmatprep.subr.mxu0 0.0
    %309 = vmatpush1.msra.mxu0 0.0
    %310 = vmatprep.subr.mxu0 0.0
    %311 = vmatpush1.msra.mxu0 0.0
    %312 = vmatprep.subr.mxu0 0.0
    %313 = vmatpush1.msra.mxu0 0.0
    %314 = vmatprep.subr.mxu0 0.0
    %315 = vmatpush1.msra.mxu0 0.0
    %316 = vmatprep.subr.mxu0 0.0
    %317 = vmatpush1.msra.mxu0 0.0
    %318 = vmatprep.subr.mxu0 0.0
    %319 = vmatpush1.msra.mxu0 0.0
    %320 = vmatprep.subr.mxu0 0.0
    %321 = vmatpush1.msra.mxu0 0.0
    %322 = vmatprep.subr.mxu0 0.0
    %323 = vmatpush1.msra.mxu0 0.0
    %324 = vmatprep.subr.mxu0 0.0
    %325 = vmatpush1.msra.mxu0 0.0
    %326 = vmatprep.subr.mxu0 0.0
    %327 = vmatpush1.msra.mxu0 0.0
    %328 = vmatprep.subr.mxu0 0.0
    %329 = vmatpush1.msra.mxu0 0.0
    %330 = vmatprep.subr.mxu0 0.0
    %331 = vmatpush1.msra.mxu0 0.0
    %332 = vmatprep.subr.mxu0 0.0
    %333 = vmatpush1.msra.mxu0 0.0
    %334 = vmatprep.subr.mxu0 0.0
    %335 = vmatpush1.msra.mxu0 0.0
    %336 = vmatprep.subr.mxu0 0.0
    %337 = vmatpush1.msra.mxu0 0.0
    %338 = vmatprep.mubr.f32.mxu0 0.0
    %339 = vmatmul.mubr.f32.gmra.mrb[0].mxu0 %v272
    %v340 = vpop.f32.mrb[0].mxu0
    %v341 = vadd.f32 0.0, %v340
    %v342 = vpop.f32.mrb[0].mxu0
    %v343 = vadd.f32 0.0, %v342
    %344 = vdwg.mxu0
    %v345 = vadd.f32 %v269, %v341
    %v346 = vadd.f32 %v270, %v343
    %v347 = vxor.u32 %v345, 2147483648
    %v348 = vxor.u32 %v346, 2147483648
    %v349 = vmul.f32 %v347, 1.442695
    %v350 = vpow.pop %v349
    %v351 = vmul.f32 %v348, 1.442695
    %v352 = vpow.pop %v351
    %v353 = vadd.f32 %v350, 1.0
    %v354 = vadd.f32 %v352, 1.0
    %v355 = vrcp.pop %v353
    %v356 = vmul.f32 1.0, %v355
    %v357 = vrcp.pop %v354
    %v358 = vmul.f32 1.0, %v357
    %v359 = vtanh.pop %v346
    %v360 = vmul.f32 %v356, %v261
    %362 = vrot.lane.b32.xlu0 %v359, 64
    %v363 = vpop.permute.xlu0 %362
    %v365 = vmul.f32 %v356, %v363
    %367 = vrot.lane.b32.xlu0 %v365, 64
    %v368 = vpop.permute.xlu0 %367
    %v370 = vadd.f32 %v360, %v368
    %v371 = vtanh.pop %v370
    %373 = vrot.lane.b32.xlu0 %v371, 64
    %v374 = vpop.permute.xlu0 %373
    %v376 = vmul.f32 %v358, %v374
    %s377 = scalar_lea.vmem %s0, 48
    %v378 = vld [vmem:[%s377] sm:$0xff]
    %v379 = vld [vmem:[%s377 + $0x8] sm:$0xff]
    %v381 = vsel %vm48, %v376, 0
    %383 = vmatprep.subr.mxu0 %v33
    %384 = vmatpush1.msra.mxu0 %v32
    %385 = vmatprep.subr.mxu0 %v35
    %386 = vmatpush1.msra.mxu0 %v34
    %387 = vmatprep.subr.mxu0 %v37
    %388 = vmatpush1.msra.mxu0 %v36
    %389 = vmatprep.subr.mxu0 %v39
    %390 = vmatpush1.msra.mxu0 %v38
    %391 = vmatprep.subr.mxu0 %v41
    %392 = vmatpush1.msra.mxu0 %v40
    %393 = vmatprep.subr.mxu0 %v43
    %394 = vmatpush1.msra.mxu0 %v42
    %395 = vmatprep.subr.mxu0 %v45
    %396 = vmatpush1.msra.mxu0 %v44
    %397 = vmatprep.subr.mxu0 %v47
    %398 = vmatpush1.msra.mxu0 %v46
    %399 = vmatprep.subr.mxu0 0.0
    %400 = vmatpush1.msra.mxu0 0.0
    %401 = vmatprep.subr.mxu0 0.0
    %402 = vmatpush1.msra.mxu0 0.0
    %403 = vmatprep.subr.mxu0 0.0
    %404 = vmatpush1.msra.mxu0 0.0
    %405 = vmatprep.subr.mxu0 0.0
    %406 = vmatpush1.msra.mxu0 0.0
    %407 = vmatprep.subr.mxu0 0.0
    %408 = vmatpush1.msra.mxu0 0.0
    %409 = vmatprep.subr.mxu0 0.0
    %410 = vmatpush1.msra.mxu0 0.0
    %411 = vmatprep.subr.mxu0 0.0
    %412 = vmatpush1.msra.mxu0 0.0
    %413 = vmatprep.subr.mxu0 0.0
    %414 = vmatpush1.msra.mxu0 0.0
    %415 = vmatprep.subr.mxu0 0.0
    %416 = vmatpush1.msra.mxu0 0.0
    %417 = vmatprep.subr.mxu0 0.0
    %418 = vmatpush1.msra.mxu0 0.0
    %419 = vmatprep.subr.mxu0 0.0
    %420 = vmatpush1.msra.mxu0 0.0
    %421 = vmatprep.subr.mxu0 0.0
    %422 = vmatpush1.msra.mxu0 0.0
    %423 = vmatprep.subr.mxu0 0.0
    %424 = vmatpush1.msra.mxu0 0.0
    %425 = vmatprep.subr.mxu0 0.0
    %426 = vmatpush1.msra.mxu0 0.0
    %427 = vmatprep.subr.mxu0 0.0
    %428 = vmatpush1.msra.mxu0 0.0
    %429 = vmatprep.subr.mxu0 0.0
    %430 = vmatpush1.msra.mxu0 0.0
    %431 = vmatprep.subr.mxu0 0.0
    %432 = vmatpush1.msra.mxu0 0.0
    %433 = vmatprep.subr.mxu0 0.0
    %434 = vmatpush1.msra.mxu0 0.0
    %435 = vmatprep.subr.mxu0 0.0
    %436 = vmatpush1.msra.mxu0 0.0
    %437 = vmatprep.subr.mxu0 0.0
    %438 = vmatpush1.msra.mxu0 0.0
    %439 = vmatprep.subr.mxu0 0.0
    %440 = vmatpush1.msra.mxu0 0.0
    %441 = vmatprep.subr.mxu0 0.0
    %442 = vmatpush1.msra.mxu0 0.0
    %443 = vmatprep.subr.mxu0 0.0
    %444 = vmatpush1.msra.mxu0 0.0
    %445 = vmatprep.subr.mxu0 0.0
    %446 = vmatpush1.msra.mxu0 0.0
    %447 = vmatprep.mubr.f32.mxu0 0.0
    %448 = vmatmul.mubr.f32.gmra.mrb[0].mxu0 %v381
    %v449 = vpop.f32.mrb[0].mxu0
    %v450 = vadd.f32 0.0, %v449
    %v451 = vpop.f32.mrb[0].mxu0
    %v452 = vadd.f32 0.0, %v451
    %453 = vdwg.mxu0
    %v454 = vadd.f32 %v378, %v450
    %v455 = vadd.f32 %v379, %v452
    %v456 = vxor.u32 %v454, 2147483648
    %v457 = vxor.u32 %v455, 2147483648
    %v458 = vmul.f32 %v456, 1.442695
    %v459 = vpow.pop %v458
    %v460 = vmul.f32 %v457, 1.442695
    %v461 = vpow.pop %v460
    %v462 = vadd.f32 %v459, 1.0
    %v463 = vadd.f32 %v461, 1.0
    %v464 = vrcp.pop %v462
    %v465 = vmul.f32 1.0, %v464
    %v466 = vrcp.pop %v463
    %v467 = vmul.f32 1.0, %v466
    %v468 = vtanh.pop %v455
    %v469 = vmul.f32 %v465, %v370
    %471 = vrot.lane.b32.xlu0 %v468, 64
    %v472 = vpop.permute.xlu0 %471
    %v474 = vmul.f32 %v465, %v472
    %476 = vrot.lane.b32.xlu0 %v474, 64
    %v477 = vpop.permute.xlu0 %476
    %v479 = vadd.f32 %v469, %v477
    %v480 = vtanh.pop %v479
    %482 = vrot.lane.b32.xlu0 %v480, 64
    %v483 = vpop.permute.xlu0 %482
    %v485 = vmul.f32 %v467, %v483
    %s486 = scalar_lea.vmem %s0, 64
    %v487 = vld [vmem:[%s486] sm:$0xff]
    %v488 = vld [vmem:[%s486 + $0x8] sm:$0xff]
    %v490 = vsel %vm48, %v485, 0
    %492 = vmatprep.subr.mxu0 %v33
    %493 = vmatpush1.msra.mxu0 %v32
    %494 = vmatprep.subr.mxu0 %v35
    %495 = vmatpush1.msra.mxu0 %v34
    %496 = vmatprep.subr.mxu0 %v37
    %497 = vmatpush1.msra.mxu0 %v36
    %498 = vmatprep.subr.mxu0 %v39
    %499 = vmatpush1.msra.mxu0 %v38
    %500 = vmatprep.subr.mxu0 %v41
    %501 = vmatpush1.msra.mxu0 %v40
    %502 = vmatprep.subr.mxu0 %v43
    %503 = vmatpush1.msra.mxu0 %v42
    %504 = vmatprep.subr.mxu0 %v45
    %505 = vmatpush1.msra.mxu0 %v44
    %506 = vmatprep.subr.mxu0 %v47
    %507 = vmatpush1.msra.mxu0 %v46
    %508 = vmatprep.subr.mxu0 0.0
    %509 = vmatpush1.msra.mxu0 0.0
    %510 = vmatprep.subr.mxu0 0.0
    %511 = vmatpush1.msra.mxu0 0.0
    %512 = vmatprep.subr.mxu0 0.0
    %513 = vmatpush1.msra.mxu0 0.0
    %514 = vmatprep.subr.mxu0 0.0
    %515 = vmatpush1.msra.mxu0 0.0
    %516 = vmatprep.subr.mxu0 0.0
    %517 = vmatpush1.msra.mxu0 0.0
    %518 = vmatprep.subr.mxu0 0.0
    %519 = vmatpush1.msra.mxu0 0.0
    %520 = vmatprep.subr.mxu0 0.0
    %521 = vmatpush1.msra.mxu0 0.0
    %522 = vmatprep.subr.mxu0 0.0
    %523 = vmatpush1.msra.mxu0 0.0
    %524 = vmatprep.subr.mxu0 0.0
    %525 = vmatpush1.msra.mxu0 0.0
    %526 = vmatprep.subr.mxu0 0.0
    %527 = vmatpush1.msra.mxu0 0.0
    %528 = vmatprep.subr.mxu0 0.0
    %529 = vmatpush1.msra.mxu0 0.0
    %530 = vmatprep.subr.mxu0 0.0
    %531 = vmatpush1.msra.mxu0 0.0
    %532 = vmatprep.subr.mxu0 0.0
    %533 = vmatpush1.msra.mxu0 0.0
    %534 = vmatprep.subr.mxu0 0.0
    %535 = vmatpush1.msra.mxu0 0.0
    %536 = vmatprep.subr.mxu0 0.0
    %537 = vmatpush1.msra.mxu0 0.0
    %538 = vmatprep.subr.mxu0 0.0
    %539 = vmatpush1.msra.mxu0 0.0
    %540 = vmatprep.subr.mxu0 0.0
    %541 = vmatpush1.msra.mxu0 0.0
    %542 = vmatprep.subr.mxu0 0.0
    %543 = vmatpush1.msra.mxu0 0.0
    %544 = vmatprep.subr.mxu0 0.0
    %545 = vmatpush1.msra.mxu0 0.0
    %546 = vmatprep.subr.mxu0 0.0
    %547 = vmatpush1.msra.mxu0 0.0
    %548 = vmatprep.subr.mxu0 0.0
    %549 = vmatpush1.msra.mxu0 0.0
    %550 = vmatprep.subr.mxu0 0.0
    %551 = vmatpush1.msra.mxu0 0.0
    %552 = vmatprep.subr.mxu0 0.0
    %553 = vmatpush1.msra.mxu0 0.0
    %554 = vmatprep.subr.mxu0 0.0
    %555 = vmatpush1.msra.mxu0 0.0
    %556 = vmatprep.mubr.f32.mxu0 0.0
    %557 = vmatmul.mubr.f32.gmra.mrb[0].mxu0 %v490
    %v558 = vpop.f32.mrb[0].mxu0
    %v559 = vadd.f32 0.0, %v558
    %v560 = vpop.f32.mrb[0].mxu0
    %v561 = vadd.f32 0.0, %v560
    %562 = vdwg.mxu0
    %v563 = vadd.f32 %v487, %v559
    %v564 = vadd.f32 %v488, %v561
    %v565 = vxor.u32 %v563, 2147483648
    %v566 = vxor.u32 %v564, 2147483648
    %v567 = vmul.f32 %v565, 1.442695
    %v568 = vpow.pop %v567
    %v569 = vmul.f32 %v566, 1.442695
    %v570 = vpow.pop %v569
    %v571 = vadd.f32 %v568, 1.0
    %v572 = vadd.f32 %v570, 1.0
    %v573 = vrcp.pop %v571
    %v574 = vmul.f32 1.0, %v573
    %v575 = vrcp.pop %v572
    %v576 = vmul.f32 1.0, %v575
    %v577 = vtanh.pop %v564
    %v578 = vmul.f32 %v574, %v479
    %580 = vrot.lane.b32.xlu0 %v577, 64
    %v581 = vpop.permute.xlu0 %580
    %v583 = vmul.f32 %v574, %v581
    %585 = vrot.lane.b32.xlu0 %v583, 64
    %v586 = vpop.permute.xlu0 %585
    %v588 = vadd.f32 %v578, %v586
    %v589 = vtanh.pop %v588
    %591 = vrot.lane.b32.xlu0 %v589, 64
    %v592 = vpop.permute.xlu0 %591
    %v594 = vmul.f32 %v576, %v592
    %s595 = scalar_lea.vmem %s0, 80
    %v596 = vld [vmem:[%s595] sm:$0xff]
    %v597 = vld [vmem:[%s595 + $0x8] sm:$0xff]
    %v599 = vsel %vm48, %v594, 0
    %601 = vmatprep.subr.mxu0 %v33
    %602 = vmatpush1.msra.mxu0 %v32
    %603 = vmatprep.subr.mxu0 %v35
    %604 = vmatpush1.msra.mxu0 %v34
    %605 = vmatprep.subr.mxu0 %v37
    %606 = vmatpush1.msra.mxu0 %v36
    %607 = vmatprep.subr.mxu0 %v39
    %608 = vmatpush1.msra.mxu0 %v38
    %609 = vmatprep.subr.mxu0 %v41
    %610 = vmatpush1.msra.mxu0 %v40
    %611 = vmatprep.subr.mxu0 %v43
    %612 = vmatpush1.msra.mxu0 %v42
    %613 = vmatprep.subr.mxu0 %v45
    %614 = vmatpush1.msra.mxu0 %v44
    %615 = vmatprep.subr.mxu0 %v47
    %616 = vmatpush1.msra.mxu0 %v46
    %617 = vmatprep.subr.mxu0 0.0
    %618 = vmatpush1.msra.mxu0 0.0
    %619 = vmatprep.subr.mxu0 0.0
    %620 = vmatpush1.msra.mxu0 0.0
    %621 = vmatprep.subr.mxu0 0.0
    %622 = vmatpush1.msra.mxu0 0.0
    %623 = vmatprep.subr.mxu0 0.0
    %624 = vmatpush1.msra.mxu0 0.0
    %625 = vmatprep.subr.mxu0 0.0
    %626 = vmatpush1.msra.mxu0 0.0
    %627 = vmatprep.subr.mxu0 0.0
    %628 = vmatpush1.msra.mxu0 0.0
    %629 = vmatprep.subr.mxu0 0.0
    %630 = vmatpush1.msra.mxu0 0.0
    %631 = vmatprep.subr.mxu0 0.0
    %632 = vmatpush1.msra.mxu0 0.0
    %633 = vmatprep.subr.mxu0 0.0
    %634 = vmatpush1.msra.mxu0 0.0
    %635 = vmatprep.subr.mxu0 0.0
    %636 = vmatpush1.msra.mxu0 0.0
    %637 = vmatprep.subr.mxu0 0.0
    %638 = vmatpush1.msra.mxu0 0.0
    %639 = vmatprep.subr.mxu0 0.0
    %640 = vmatpush1.msra.mxu0 0.0
    %641 = vmatprep.subr.mxu0 0.0
    %642 = vmatpush1.msra.mxu0 0.0
    %643 = vmatprep.subr.mxu0 0.0
    %644 = vmatpush1.msra.mxu0 0.0
    %645 = vmatprep.subr.mxu0 0.0
    %646 = vmatpush1.msra.mxu0 0.0
    %647 = vmatprep.subr.mxu0 0.0
    %648 = vmatpush1.msra.mxu0 0.0
    %649 = vmatprep.subr.mxu0 0.0
    %650 = vmatpush1.msra.mxu0 0.0
    %651 = vmatprep.subr.mxu0 0.0
    %652 = vmatpush1.msra.mxu0 0.0
    %653 = vmatprep.subr.mxu0 0.0
    %654 = vmatpush1.msra.mxu0 0.0
    %655 = vmatprep.subr.mxu0 0.0
    %656 = vmatpush1.msra.mxu0 0.0
    %657 = vmatprep.subr.mxu0 0.0
    %658 = vmatpush1.msra.mxu0 0.0
    %659 = vmatprep.subr.mxu0 0.0
    %660 = vmatpush1.msra.mxu0 0.0
    %661 = vmatprep.subr.mxu0 0.0
    %662 = vmatpush1.msra.mxu0 0.0
    %663 = vmatprep.subr.mxu0 0.0
    %664 = vmatpush1.msra.mxu0 0.0
    %665 = vmatprep.mubr.f32.mxu0 0.0
    %666 = vmatmul.mubr.f32.gmra.mrb[0].mxu0 %v599
    %v667 = vpop.f32.mrb[0].mxu0
    %v668 = vadd.f32 0.0, %v667
    %v669 = vpop.f32.mrb[0].mxu0
    %v670 = vadd.f32 0.0, %v669
    %671 = vdwg.mxu0
    %v672 = vadd.f32 %v596, %v668
    %v673 = vadd.f32 %v597, %v670
    %v674 = vxor.u32 %v672, 2147483648
    %v675 = vxor.u32 %v673, 2147483648
    %v676 = vmul.f32 %v674, 1.442695
    %v677 = vpow.pop %v676
    %v678 = vmul.f32 %v675, 1.442695
    %v679 = vpow.pop %v678
    %v680 = vadd.f32 %v677, 1.0
    %v681 = vadd.f32 %v679, 1.0
    %v682 = vrcp.pop %v680
    %v683 = vmul.f32 1.0, %v682
    %v684 = vrcp.pop %v681
    %v685 = vmul.f32 1.0, %v684
    %v686 = vtanh.pop %v673
    %v687 = vmul.f32 %v683, %v588
    %689 = vrot.lane.b32.xlu0 %v686, 64
    %v690 = vpop.permute.xlu0 %689
    %v692 = vmul.f32 %v683, %v690
    %694 = vrot.lane.b32.xlu0 %v692, 64
    %v695 = vpop.permute.xlu0 %694
    %v697 = vadd.f32 %v687, %v695
    %v698 = vtanh.pop %v697
    %700 = vrot.lane.b32.xlu0 %v698, 64
    %v701 = vpop.permute.xlu0 %700
    %v703 = vmul.f32 %v685, %v701
    %s704 = scalar_lea.vmem %s0, 96
    %v705 = vld [vmem:[%s704] sm:$0xff]
    %v706 = vld [vmem:[%s704 + $0x8] sm:$0xff]
    %v708 = vsel %vm48, %v703, 0
    %710 = vmatprep.subr.mxu0 %v33
    %711 = vmatpush1.msra.mxu0 %v32
    %712 = vmatprep.subr.mxu0 %v35
    %713 = vmatpush1.msra.mxu0 %v34
    %714 = vmatprep.subr.mxu0 %v37
    %715 = vmatpush1.msra.mxu0 %v36
    %716 = vmatprep.subr.mxu0 %v39
    %717 = vmatpush1.msra.mxu0 %v38
    %718 = vmatprep.subr.mxu0 %v41
    %719 = vmatpush1.msra.mxu0 %v40
    %720 = vmatprep.subr.mxu0 %v43
    %721 = vmatpush1.msra.mxu0 %v42
    %722 = vmatprep.subr.mxu0 %v45
    %723 = vmatpush1.msra.mxu0 %v44
    %724 = vmatprep.subr.mxu0 %v47
    %725 = vmatpush1.msra.mxu0 %v46
    %726 = vmatprep.subr.mxu0 0.0
    %727 = vmatpush1.msra.mxu0 0.0
    %728 = vmatprep.subr.mxu0 0.0
    %729 = vmatpush1.msra.mxu0 0.0
    %730 = vmatprep.subr.mxu0 0.0
    %731 = vmatpush1.msra.mxu0 0.0
    %732 = vmatprep.subr.mxu0 0.0
    %733 = vmatpush1.msra.mxu0 0.0
    %734 = vmatprep.subr.mxu0 0.0
    %735 = vmatpush1.msra.mxu0 0.0
    %736 = vmatprep.subr.mxu0 0.0
    %737 = vmatpush1.msra.mxu0 0.0
    %738 = vmatprep.subr.mxu0 0.0
    %739 = vmatpush1.msra.mxu0 0.0
    %740 = vmatprep.subr.mxu0 0.0
    %741 = vmatpush1.msra.mxu0 0.0
    %742 = vmatprep.subr.mxu0 0.0
    %743 = vmatpush1.msra.mxu0 0.0
    %744 = vmatprep.subr.mxu0 0.0
    %745 = vmatpush1.msra.mxu0 0.0
    %746 = vmatprep.subr.mxu0 0.0
    %747 = vmatpush1.msra.mxu0 0.0
    %748 = vmatprep.subr.mxu0 0.0
    %749 = vmatpush1.msra.mxu0 0.0
    %750 = vmatprep.subr.mxu0 0.0
    %751 = vmatpush1.msra.mxu0 0.0
    %752 = vmatprep.subr.mxu0 0.0
    %753 = vmatpush1.msra.mxu0 0.0
    %754 = vmatprep.subr.mxu0 0.0
    %755 = vmatpush1.msra.mxu0 0.0
    %756 = vmatprep.subr.mxu0 0.0
    %757 = vmatpush1.msra.mxu0 0.0
    %758 = vmatprep.subr.mxu0 0.0
    %759 = vmatpush1.msra.mxu0 0.0
    %760 = vmatprep.subr.mxu0 0.0
    %761 = vmatpush1.msra.mxu0 0.0
    %762 = vmatprep.subr.mxu0 0.0
    %763 = vmatpush1.msra.mxu0 0.0
    %764 = vmatprep.subr.mxu0 0.0
    %765 = vmatpush1.msra.mxu0 0.0
    %766 = vmatprep.subr.mxu0 0.0
    %767 = vmatpush1.msra.mxu0 0.0
    %768 = vmatprep.subr.mxu0 0.0
    %769 = vmatpush1.msra.mxu0 0.0
    %770 = vmatprep.subr.mxu0 0.0
    %771 = vmatpush1.msra.mxu0 0.0
    %772 = vmatprep.subr.mxu0 0.0
    %773 = vmatpush1.msra.mxu0 0.0
    %774 = vmatprep.mubr.f32.mxu0 0.0
    %775 = vmatmul.mubr.f32.gmra.mrb[0].mxu0 %v708
    %v776 = vpop.f32.mrb[0].mxu0
    %v777 = vadd.f32 0.0, %v776
    %v778 = vpop.f32.mrb[0].mxu0
    %v779 = vadd.f32 0.0, %v778
    %780 = vdwg.mxu0
    %v781 = vadd.f32 %v705, %v777
    %v782 = vadd.f32 %v706, %v779
    %v783 = vxor.u32 %v781, 2147483648
    %v784 = vxor.u32 %v782, 2147483648
    %v785 = vmul.f32 %v783, 1.442695
    %v786 = vpow.pop %v785
    %v787 = vmul.f32 %v784, 1.442695
    %v788 = vpow.pop %v787
    %v789 = vadd.f32 %v786, 1.0
    %v790 = vadd.f32 %v788, 1.0
    %v791 = vrcp.pop %v789
    %v792 = vmul.f32 1.0, %v791
    %v793 = vrcp.pop %v790
    %v794 = vmul.f32 1.0, %v793
    %v795 = vtanh.pop %v782
    %v796 = vmul.f32 %v792, %v697
    %798 = vrot.lane.b32.xlu0 %v795, 64
    %v799 = vpop.permute.xlu0 %798
    %v801 = vmul.f32 %v792, %v799
    %803 = vrot.lane.b32.xlu0 %v801, 64
    %v804 = vpop.permute.xlu0 %803
    %v806 = vadd.f32 %v796, %v804
    %v807 = vtanh.pop %v806
    %809 = vrot.lane.b32.xlu0 %v807, 64
    %v810 = vpop.permute.xlu0 %809
    %v812 = vmul.f32 %v794, %v810
    %s813 = scalar_lea.vmem %s0, 112
    %v814 = vld [vmem:[%s813] sm:$0xff]
    %v815 = vld [vmem:[%s813 + $0x8] sm:$0xff]
    %v817 = vsel %vm48, %v812, 0
    %819 = vmatprep.subr.mxu0 %v33
    %820 = vmatpush1.msra.mxu0 %v32
    %821 = vmatprep.subr.mxu0 %v35
    %822 = vmatpush1.msra.mxu0 %v34
    %823 = vmatprep.subr.mxu0 %v37
    %824 = vmatpush1.msra.mxu0 %v36
    %825 = vmatprep.subr.mxu0 %v39
    %826 = vmatpush1.msra.mxu0 %v38
    %827 = vmatprep.subr.mxu0 %v41
    %828 = vmatpush1.msra.mxu0 %v40
    %829 = vmatprep.subr.mxu0 %v43
    %830 = vmatpush1.msra.mxu0 %v42
    %831 = vmatprep.subr.mxu0 %v45
    %832 = vmatpush1.msra.mxu0 %v44
    %833 = vmatprep.subr.mxu0 %v47
    %834 = vmatpush1.msra.mxu0 %v46
    %835 = vmatprep.subr.mxu0 0.0
    %836 = vmatpush1.msra.mxu0 0.0
    %837 = vmatprep.subr.mxu0 0.0
    %838 = vmatpush1.msra.mxu0 0.0
    %839 = vmatprep.subr.mxu0 0.0
    %840 = vmatpush1.msra.mxu0 0.0
    %841 = vmatprep.subr.mxu0 0.0
    %842 = vmatpush1.msra.mxu0 0.0
    %843 = vmatprep.subr.mxu0 0.0
    %844 = vmatpush1.msra.mxu0 0.0
    %845 = vmatprep.subr.mxu0 0.0
    %846 = vmatpush1.msra.mxu0 0.0
    %847 = vmatprep.subr.mxu0 0.0
    %848 = vmatpush1.msra.mxu0 0.0
    %849 = vmatprep.subr.mxu0 0.0
    %850 = vmatpush1.msra.mxu0 0.0
    %851 = vmatprep.subr.mxu0 0.0
    %852 = vmatpush1.msra.mxu0 0.0
    %853 = vmatprep.subr.mxu0 0.0
    %854 = vmatpush1.msra.mxu0 0.0
    %855 = vmatprep.subr.mxu0 0.0
    %856 = vmatpush1.msra.mxu0 0.0
    %857 = vmatprep.subr.mxu0 0.0
    %858 = vmatpush1.msra.mxu0 0.0
    %859 = vmatprep.subr.mxu0 0.0
    %860 = vmatpush1.msra.mxu0 0.0
    %861 = vmatprep.subr.mxu0 0.0
    %862 = vmatpush1.msra.mxu0 0.0
    %863 = vmatprep.subr.mxu0 0.0
    %864 = vmatpush1.msra.mxu0 0.0
    %865 = vmatprep.subr.mxu0 0.0
    %866 = vmatpush1.msra.mxu0 0.0
    %867 = vmatprep.subr.mxu0 0.0
    %868 = vmatpush1.msra.mxu0 0.0
    %869 = vmatprep.subr.mxu0 0.0
    %870 = vmatpush1.msra.mxu0 0.0
    %871 = vmatprep.subr.mxu0 0.0
    %872 = vmatpush1.msra.mxu0 0.0
    %873 = vmatprep.subr.mxu0 0.0
    %874 = vmatpush1.msra.mxu0 0.0
    %875 = vmatprep.subr.mxu0 0.0
    %876 = vmatpush1.msra.mxu0 0.0
    %877 = vmatprep.subr.mxu0 0.0
    %878 = vmatpush1.msra.mxu0 0.0
    %879 = vmatprep.subr.mxu0 0.0
    %880 = vmatpush1.msra.mxu0 0.0
    %881 = vmatprep.subr.mxu0 0.0
    %882 = vmatpush1.msra.mxu0 0.0
    %883 = vmatprep.mubr.f32.mxu0 0.0
    %884 = vmatmul.mubr.f32.gmra.mrb[0].mxu0 %v817
    %v885 = vpop.f32.mrb[0].mxu0
    %v886 = vadd.f32 0.0, %v885
    %v887 = vpop.f32.mrb[0].mxu0
    %v888 = vadd.f32 0.0, %v887
    %889 = vdwg.mxu0
    %v890 = vadd.f32 %v814, %v886
    %v891 = vadd.f32 %v815, %v888
    %v892 = vxor.u32 %v890, 2147483648
    %v893 = vxor.u32 %v891, 2147483648
    %v894 = vmul.f32 %v892, 1.442695
    %v895 = vpow.pop %v894
    %v896 = vmul.f32 %v893, 1.442695
    %v897 = vpow.pop %v896
    %v898 = vadd.f32 %v895, 1.0
    %v899 = vadd.f32 %v897, 1.0
    %v900 = vrcp.pop %v898
    %v901 = vmul.f32 1.0, %v900
    %v902 = vrcp.pop %v899
    %v903 = vmul.f32 1.0, %v902
    %v904 = vtanh.pop %v891
    %v905 = vmul.f32 %v901, %v806
    %907 = vrot.lane.b32.xlu0 %v904, 64
    %v908 = vpop.permute.xlu0 %907
    %v910 = vmul.f32 %v901, %v908
    %912 = vrot.lane.b32.xlu0 %v910, 64
    %v913 = vpop.permute.xlu0 %912
    %v915 = vadd.f32 %v905, %v913
    %v916 = vtanh.pop %v915
    %918 = vrot.lane.b32.xlu0 %v916, 64
    %v919 = vpop.permute.xlu0 %918
    %v921 = vmul.f32 %v903, %v919
    %922 = vst.msk [vmem:[#allocation2] sm:$0xff] %vm48, %v921
    %924 = vrot.lane.b32.xlu0 %v915, 64
    %v925 = vpop.permute.xlu0 %924
    %927 = vst.msk [vmem:[#allocation3] sm:$0xff] %vm48, %v925
    // Predicated region
    $region22: #{diagnostic_rnn_forward.1} parent=1 // pred_check
      %p928 = pneg %p21
    $region23: #{diagnostic_rnn_forward.1} parent=1 // pred_check_branch
      %930 = sbr.rel (%p928) target = $region25
    $region24: #{diagnostic_rnn_forward.1} parent=1 // pred_region
      %931 = vst.msk [vmem:[#allocation6] sm:$0xff] %vm48, %v921
      %v932 = vld [vmem:[%s2] sm:$0xff]
      %v933 = vld [vmem:[%s2 + $0x8] sm:$0xff]
      %v934 = vld [vmem:[%s2 + $0x10] sm:$0xff]
      %v935 = vld [vmem:[%s2 + $0x18] sm:$0xff]
      %v936 = vld [vmem:[%s2 + $0x20] sm:$0xff]
      %v937 = vld [vmem:[%s2 + $0x28] sm:$0xff]
      %v938 = vld [vmem:[%s2 + $0x30] sm:$0xff]
      %v939 = vld [vmem:[%s2 + $0x38] sm:$0xff]
      %v940 = vld [vmem:[%s3] sm:$0x1]
      %v942 = vlaneseq
      %v943 = vshrl.u32 %v942, 7
      %v944 = vsub.s32 0, %v943
      %v945 = vrot.slane %v940, %v944
      %v948 = vsel %vm48, %v921, 0
      %950 = vmatprep.subr.mxu0 0.0
      %951 = vmatpush1.msra.mxu0 %v932
      %952 = vmatprep.subr.mxu0 0.0
      %953 = vmatpush1.msra.mxu0 %v933
      %954 = vmatprep.subr.mxu0 0.0
      %955 = vmatpush1.msra.mxu0 %v934
      %956 = vmatprep.subr.mxu0 0.0
      %957 = vmatpush1.msra.mxu0 %v935
      %958 = vmatprep.subr.mxu0 0.0
      %959 = vmatpush1.msra.mxu0 %v936
      %960 = vmatprep.subr.mxu0 0.0
      %961 = vmatpush1.msra.mxu0 %v937
      %962 = vmatprep.subr.mxu0 0.0
      %963 = vmatpush1.msra.mxu0 %v938
      %964 = vmatprep.subr.mxu0 0.0
      %965 = vmatpush1.msra.mxu0 %v939
      %966 = vmatprep.subr.mxu0 0.0
      %967 = vmatpush1.msra.mxu0 0.0
      %968 = vmatprep.subr.mxu0 0.0
      %969 = vmatpush1.msra.mxu0 0.0
      %970 = vmatprep.subr.mxu0 0.0
      %971 = vmatpush1.msra.mxu0 0.0
      %972 = vmatprep.subr.mxu0 0.0
      %973 = vmatpush1.msra.mxu0 0.0
      %974 = vmatprep.subr.mxu0 0.0
      %975 = vmatpush1.msra.mxu0 0.0
      %976 = vmatprep.subr.mxu0 0.0
      %977 = vmatpush1.msra.mxu0 0.0
      %978 = vmatprep.subr.mxu0 0.0
      %979 = vmatpush1.msra.mxu0 0.0
      %980 = vmatprep.subr.mxu0 0.0
      %981 = vmatpush1.msra.mxu0 0.0
      %982 = vmatprep.subr.mxu0 0.0
      %983 = vmatpush1.msra.mxu0 0.0
      %984 = vmatprep.subr.mxu0 0.0
      %985 = vmatpush1.msra.mxu0 0.0
      %986 = vmatprep.subr.mxu0 0.0
      %987 = vmatpush1.msra.mxu0 0.0
      %988 = vmatprep.subr.mxu0 0.0
      %989 = vmatpush1.msra.mxu0 0.0
      %990 = vmatprep.subr.mxu0 0.0
      %991 = vmatpush1.msra.mxu0 0.0
      %992 = vmatprep.subr.mxu0 0.0
      %993 = vmatpush1.msra.mxu0 0.0
      %994 = vmatprep.subr.mxu0 0.0
      %995 = vmatpush1.msra.mxu0 0.0
      %996 = vmatprep.subr.mxu0 0.0
      %997 = vmatpush1.msra.mxu0 0.0
      %998 = vmatprep.subr.mxu0 0.0
      %999 = vmatpush1.msra.mxu0 0.0
      %1000 = vmatprep.subr.mxu0 0.0
      %1001 = vmatpush1.msra.mxu0 0.0
      %1002 = vmatprep.subr.mxu0 0.0
      %1003 = vmatpush1.msra.mxu0 0.0
      %1004 = vmatprep.subr.mxu0 0.0
      %1005 = vmatpush1.msra.mxu0 0.0
      %1006 = vmatprep.subr.mxu0 0.0
      %1007 = vmatpush1.msra.mxu0 0.0
      %1008 = vmatprep.subr.mxu0 0.0
      %1009 = vmatpush1.msra.mxu0 0.0
      %1010 = vmatprep.subr.mxu0 0.0
      %1011 = vmatpush1.msra.mxu0 0.0
      %1012 = vmatprep.subr.mxu0 0.0
      %1013 = vmatpush1.msra.mxu0 0.0
      %1014 = vmatprep.mubr.f32.mxu0 0.0
      %1015 = vmatmul.mubr.f32.gmra.mrb[0].mxu0 %v948
      %v1016 = vpop.f32.mrb[0].mxu0
      %v1017 = vadd.f32 %v945, %v1016
      %v1018 = vpop.f32.mrb[0].mxu0
      %1019 = vdwg.mxu0
      %1020 = vst [vmem:[#allocation4] sm:$0xff] %v1017
    $region25: #{diagnostic_rnn_forward.1} parent=1 // pred_fallthru
      _
    // Predicated region
    $region26: #{diagnostic_rnn_forward.1} parent=1 // pred_check
      _
    $region27: #{diagnostic_rnn_forward.1} parent=1 // pred_check_branch
      %1022 = sbr.rel (0) target = $region29
    $region28: #{diagnostic_rnn_forward.1} parent=1 // pred_region
      %s1024 = ssub.s32 128, 128
      %1025 = vsyncadd [#allocation5], %s1024
      %s1027 = sshll.u32 [#allocation4], 4
      %s1028 = int_to_ptr.vmem [resolvable:$true] %s1027
      %1030 = dma.vmem_to_hbm [thread:$0]  %s1028, 128, %s4, [#allocation5]
    $region29: #{diagnostic_rnn_forward.1} parent=1 // pred_fallthru
      _
    // Predicated region
    $region30: #{diagnostic_rnn_forward.1} parent=1 // pred_check
      _
    $region31: #{diagnostic_rnn_forward.1} parent=1 // pred_check_branch
      %1032 = sbr.rel (0) target = $region33
    $region32: #{diagnostic_rnn_forward.1} parent=1 // pred_region
      %s1034 = ssub.s32 128, 128
      %1035 = vsyncadd [#allocation7], %s1034
      %s1037 = sshll.u32 [#allocation6], 4
      %s1038 = int_to_ptr.vmem [resolvable:$true] %s1037
      %1040 = dma.vmem_to_hbm [thread:$0]  %s1038, 128, %s5, [#allocation7]
    $region33: #{diagnostic_rnn_forward.1} parent=1 // pred_fallthru
      _
    // Predicated region
    $region34: #{diagnostic_rnn_forward.1} parent=1 // pred_check
      _
    $region35: #{diagnostic_rnn_forward.1} parent=1 // pred_check_branch
      %1042 = sbr.rel (0) target = $region37
    $region36: #{diagnostic_rnn_forward.1} parent=1 // pred_region
      %1043 = dma.done [#allocation5], 128
    $region37: #{diagnostic_rnn_forward.1} parent=1 // pred_fallthru
      _
    // Predicated region
    $region38: #{diagnostic_rnn_forward.1} parent=1 // pred_check
      _
    $region39: #{diagnostic_rnn_forward.1} parent=1 // pred_check_branch
      %1045 = sbr.rel (0) target = $region41
    $region40: #{diagnostic_rnn_forward.1} parent=1 // pred_region
      %1046 = dma.done [#allocation7], 128
    $region41: #{diagnostic_rnn_forward.1} parent=1 // pred_fallthru
      _
    %1047 = vsyncpa [#allocation5], 1
    %1048 = vsyncpa [#allocation7], 1

</llo_original>
